<compile_context>
chip_gen: v6e
topology: v6e:2x2x1
jax: 0.10.0
libtpu: 0.0.40
codegen_flags: <defaults>
</compile_context>

<pallas_src>
import functools

import jax
import jax.numpy as jnp
from jax import lax
from jax.experimental import pallas as pl
from jax.experimental.pallas import tpu as pltpu


def _conv_mm_relu_kernel(p_ref, w_ref, b_ref, o_ref):
    # p_ref: (1, K, TM)   w_ref: (Cout, K)   b_ref: (Cout, 1)   o_ref: (1, Cout, TM)
    acc = jnp.dot(w_ref[...], p_ref[0], preferred_element_type=jnp.float32)
    acc = acc + b_ref[...]                      # lane-broadcast of the bias
    o_ref[0] = jnp.maximum(acc, 0.0).astype(o_ref.dtype)


def _im2col_nchw_kmajor(x_nchw, k_size, stride, padding):
    """JAX glue: build K-major patches (N, k*k*Cin, Hout*Wout) from NCHW.

    K is ordered (kh, kw, Cin); M (= lanes in the kernel) is (Hout, Wout).
    No NCHW<->NHWC transposes are needed anywhere.
    """
    N, Cin, H, W = x_nchw.shape
    Hout = (H + 2 * padding - k_size) // stride + 1
    Wout = (W + 2 * padding - k_size) // stride + 1
    x_p = jnp.pad(x_nchw, ((0, 0), (0, 0), (padding, padding), (padding, padding)))
    taps = []
    for i in range(k_size):
        for j in range(k_size):
            taps.append(
                x_p[:, :, i:i + stride * Hout:stride, j:j + stride * Wout:stride]
            )
    # (N, k*k, Cin, Hout, Wout) -> (N, k*k*Cin, Hout*Wout)  (contiguous reshape)
    patches = jnp.stack(taps, axis=1).reshape(N, k_size * k_size * Cin, Hout * Wout)
    return patches, Hout, Wout


def _pick_tile_m(hw, k_dim, cout, budget_bytes=24 * 1024 * 1024, max_tile=2048):
    """Largest lane-aligned spatial tile that fits the double-buffered VMEM budget."""
    if hw <= 128:
        return hw                               # full (small) last dim
    bytes_per_col = 2 * (k_dim + cout) * 4      # in + out, double-buffered, f32
    cols = max(128, min(budget_bytes // bytes_per_col, max_tile))
    cols = (cols // 128) * 128
    if hw <= cols:
        return hw                               # whole spatial extent in one block
    return cols


@functools.partial(jax.jit, static_argnames=("k_size", "stride", "padding", "tile_m"))
def cr_forward(x_nchw, weight, bias, *, k_size, stride, padding, tile_m=None):
    """Forward pass of CR: Conv2d(stride, padding) followed by ReLU.

    x_nchw : (N, Cin, H, W)      float32
    weight : (Cout, Cin, k, k)   float32  (PyTorch Conv2d layout)
    bias   : (Cout,)             float32
    returns: (N, Cout, Hout, Wout)
    """
    N, Cin, H, W = x_nchw.shape
    Cout = weight.shape[0]

    patches, Hout, Wout = _im2col_nchw_kmajor(x_nchw, k_size, stride, padding)
    K = k_size * k_size * Cin
    HW = Hout * Wout

    # Weight reordered to match the (kh, kw, Cin) K ordering of the patches.
    w_mat = jnp.transpose(weight, (0, 2, 3, 1)).reshape(Cout, K)
    b_mat = bias.reshape(Cout, 1)

    TM = tile_m if tile_m is not None else _pick_tile_m(HW, K, Cout)
    grid = (N, pl.cdiv(HW, TM))

    cost = pl.CostEstimate(
        flops=2 * N * K * HW * Cout,
        transcendentals=0,
        bytes_accessed=4 * (N * K * HW + Cout * K + Cout + N * Cout * HW),
    )

    out_flat = pl.pallas_call(
        _conv_mm_relu_kernel,
        out_shape=jax.ShapeDtypeStruct((N, Cout, HW), x_nchw.dtype),
        grid_spec=pltpu.PrefetchScalarGridSpec(
            num_scalar_prefetch=0,
            grid=grid,
            in_specs=[
                pl.BlockSpec((1, K, TM), lambda n, m: (n, 0, m)),   # patches tile
                pl.BlockSpec((Cout, K), lambda n, m: (0, 0)),       # weights (resident)
                pl.BlockSpec((Cout, 1), lambda n, m: (0, 0)),       # bias (resident)
            ],
            out_specs=pl.BlockSpec((1, Cout, TM), lambda n, m: (n, 0, m)),
        ),
        compiler_params=pltpu.CompilerParams(
            dimension_semantics=("parallel", "parallel"),
            vmem_limit_bytes=48 * 1024 * 1024,
        ),
        cost_estimate=cost,
    )(patches, w_mat, b_mat)

    # (N, Cout, Hout*Wout) -> (N, Cout, Hout, Wout): contiguous reshape, free.
    return out_flat.reshape(N, Cout, Hout, Wout)


def _reference(x_nchw, weight, bias, stride, padding):
    y = lax.conv_general_dilated(
        x_nchw, weight,
        window_strides=(stride, stride),
        padding=[(padding, padding), (padding, padding)],
        dimension_numbers=("NCHW", "OIHW", "NCHW"),
    )
    y = y + bias.reshape(1, -1, 1, 1)
    return jnp.maximum(y, 0.0)


if __name__ == "__main__":
    # CR(in_channels=4, out_channels=8, k_size=3, stride=1, padding=1)
    in_channels, out_channels = 4, 8
    k_size, stride, padding = 3, 1, 1
    N, H, W = 2, 16, 16

    key = jax.random.PRNGKey(0)
    kx, kw_, kb = jax.random.split(key, 3)

    # Deterministic PyTorch-Conv2d-style init: U(-bound, bound), bound = 1/sqrt(fan_in)
    fan_in = in_channels * k_size * k_size
    bound = 1.0 / (fan_in ** 0.5)
    x = jax.random.normal(kx, (N, in_channels, H, W), dtype=jnp.float32)
    weight = jax.random.uniform(kw_, (out_channels, in_channels, k_size, k_size),
                                minval=-bound, maxval=bound, dtype=jnp.float32)
    bias = jax.random.uniform(kb, (out_channels,),
                              minval=-bound, maxval=bound, dtype=jnp.float32)

    # 1) Main config from the module.
    out = cr_forward(x, weight, bias, k_size=k_size, stride=stride, padding=padding)
    out = jax.block_until_ready(out)
    ref = _reference(x, weight, bias, stride, padding)
    assert out.shape == ref.shape, (out.shape, ref.shape)
    assert jnp.allclose(out, ref, atol=1e-4, rtol=1e-4), "mismatch vs reference conv"

    # 2) Larger spatial extent with a forced 128-wide tile: exercises the
    #    multi-tile pipelined grid path (grid = (2, 8)).
    x2 = jax.random.normal(jax.random.PRNGKey(1), (2, in_channels, 32, 32),
                           dtype=jnp.float32)
    out2 = jax.block_until_ready(
        cr_forward(x2, weight, bias, k_size=3, stride=1, padding=1, tile_m=128))
    ref2 = _reference(x2, weight, bias, 1, 1)
    assert out2.shape == ref2.shape, (out2.shape, ref2.shape)
    assert jnp.allclose(out2, ref2, atol=1e-4, rtol=1e-4), "mismatch (tiled path)"

    # 3) Strided conv through the same kernel.
    out3 = jax.block_until_ready(
        cr_forward(x, weight, bias, k_size=3, stride=2, padding=1))
    ref3 = _reference(x, weight, bias, 2, 1)
    assert out3.shape == ref3.shape, (out3.shape, ref3.shape)
    assert jnp.allclose(out3, ref3, atol=1e-4, rtol=1e-4), "mismatch (strided path)"

    print("KERNEL_OK")
</pallas_src>

<mosaic_0001>
module attributes {stable_mosaic.version = 11 : i64} {
  func.func @_conv_mm_relu_kernel(%arg0: i32, %arg1: i32, %arg2: memref<1x36x256xf32, #tpu.memory_space<vmem>>, %arg3: memref<8x36xf32, #tpu.memory_space<vmem>>, %arg4: memref<8x1xf32, #tpu.memory_space<vmem>>, %arg5: memref<1x8x256xf32, #tpu.memory_space<vmem>>) attributes {dimension_semantics = [#tpu.dimension_semantics<parallel>, #tpu.dimension_semantics<parallel>], iteration_bounds = array<i64: 2, 1>, scalar_prefetch = 0 : i64, scratch_operands = 0 : i64, tpu.core_type = #tpu.core_type<tc>, window_params = [{transform_indices = @transform_0, window_bounds = array<i64: 1, 36, 256>}, {pipeline_mode = #tpu.pipeline_mode<synchronous>, transform_indices = @transform_1, window_bounds = array<i64: 8, 36>}, {pipeline_mode = #tpu.pipeline_mode<synchronous>, transform_indices = @transform_2, window_bounds = array<i64: 8, 1>}, {transform_indices = @transform_3, window_bounds = array<i64: 1, 8, 256>}]} {
    %c0 = arith.constant 0 : index
    %c0_0 = arith.constant 0 : index
    %0 = vector.load %arg3[%c0, %c0_0] : memref<8x36xf32, #tpu.memory_space<vmem>>, vector<8x36xf32>
    %c0_1 = arith.constant 0 : index
    %c0_2 = arith.constant 0 : index
    %c0_3 = arith.constant 0 : index
    %1 = vector.load %arg2[%c0_1, %c0_2, %c0_3] : memref<1x36x256xf32, #tpu.memory_space<vmem>>, vector<1x36x256xf32>
    %2 = vector.shape_cast %1 : vector<1x36x256xf32> to vector<36x256xf32>
    %cst = arith.constant dense<0.000000e+00> : vector<8x256xf32>
    %3 = tpu.matmul %0, %2, %cst {dimension_numbers = #tpu.dot_dimension_numbers<[1], [0], [0], [1], [0, 0, 1, 1], [], []>} : vector<8x36xf32>, vector<36x256xf32>, vector<8x256xf32> -> vector<8x256xf32>
    %c0_4 = arith.constant 0 : index
    %c0_5 = arith.constant 0 : index
    %4 = vector.load %arg4[%c0_4, %c0_5] : memref<8x1xf32, #tpu.memory_space<vmem>>, vector<8x1xf32>
    %5 = vector.broadcast %4 : vector<8x1xf32> to vector<8x256xf32>
    %6 = arith.addf %3, %5 : vector<8x256xf32>
    %cst_6 = arith.constant 0.000000e+00 : f32
    %7 = vector.broadcast %cst_6 : f32 to vector<8x256xf32>
    %8 = arith.maximumf %6, %7 : vector<8x256xf32>
    %c0_7 = arith.constant 0 : index
    %c0_8 = arith.constant 0 : index
    %c0_9 = arith.constant 0 : index
    %9 = vector.load %arg5[%c0_7, %c0_8, %c0_9] : memref<1x8x256xf32, #tpu.memory_space<vmem>>, vector<1x8x256xf32>
    %10 = vector.shape_cast %9 : vector<1x8x256xf32> to vector<8x256xf32>
    %11 = vector.shape_cast %8 : vector<8x256xf32> to vector<1x8x256xf32>
    tpu.vector_store %arg5[%c0_7, %c0_8, %c0_9], %11 {strides = array<i32>} : memref<1x8x256xf32, #tpu.memory_space<vmem>>, vector<1x8x256xf32>,
    return
  }
  func.func @transform_0(%arg0: i32, %arg1: i32) -> (i32, i32, i32) {
    %c0_i32 = arith.constant 0 : i32
    %c0_i32_0 = arith.constant 0 : i32
    return %arg0, %c0_i32, %arg1 : i32, i32, i32
  }
  func.func @transform_1(%arg0: i32, %arg1: i32) -> (i32, i32) {
    %c0_i32 = arith.constant 0 : i32
    %c0_i32_0 = arith.constant 0 : i32
    %c0_i32_1 = arith.constant 0 : i32
    return %c0_i32, %c0_i32_0 : i32, i32
  }
  func.func @transform_2(%arg0: i32, %arg1: i32) -> (i32, i32) {
    %c0_i32 = arith.constant 0 : i32
    %c0_i32_0 = arith.constant 0 : i32
    %c0_i32_1 = arith.constant 0 : i32
    return %c0_i32, %c0_i32_0 : i32, i32
  }
  func.func @transform_3(%arg0: i32, %arg1: i32) -> (i32, i32, i32) {
    %c0_i32 = arith.constant 0 : i32
    %c0_i32_0 = arith.constant 0 : i32
    return %arg0, %c0_i32, %arg1 : i32, i32, i32
  }
}

</mosaic_0001>

<llo_original>
// kernel: cr_forward.1
$region0: #{cr_forward.1}
  #allocation0 [shape = 'u32[]', space=smem, size = 0x4, offset = 0x4, fixed_abs, tag = 'smem constant byte address 0x4 - core index']
  #allocation1 [shape = 'u32[144,128]{1,0:T(1,128)}', space=vmem, size = 0x12000, scoped, tag = 'internal scratch']
  %s0 = inlined_call_operand.vmem [shape: f32[2,36,256], index: 0, kind: input, shape index: {}]
  %s1 = inlined_call_operand.vmem [shape: f32[8,36], index: 1, kind: input, shape index: {}]
  %s2 = inlined_call_operand.vmem [shape: f32[8,1], index: 2, kind: input, shape index: {}]
  %s3 = inlined_call_operand.vmem [shape: f32[2,8,256], index: 3, kind: output, shape index: {}]
  %s4 = sld [smem:[#allocation0]]
  $region45: #{cr_forward.1} parent=0
    _
  %s6 = ssub.s32 1, %s4
  %s7 = scalar_select 0, %s6, %s4
  loop: start=0, step=1, limit=4
  $region2: #{cr_forward.1} parent=0 // loop_pre_header
    _
  $region3: #{cr_forward.1} parent=0 // loop_header
    %s9 = sphi 0, %s13
    %p10 = scmp.ge.s32.totalorder %s9, 4
    %s16 = sphi 0, %s28
    %s17 = sphi 0, %s24
    %s18 = sphi 0, %s16
    %s19 = sphi 0, %s17
    %s20 = sphi 0, %s18
    %s21 = sphi 0, %s19
    %s33 = sphi 0, %s35
    %s36 = sphi 0, %s33
    %s37 = sphi 0, %s36
    %s53 = sphi 0, %s37
    %s57 = sphi 0, %s57
    %s59 = sphi 0, %s57
    %s60 = sphi 0, %s59
    %s74 = sphi 0, %s60
    %s78 = sphi 0, %s78
    %s80 = sphi 0, %s78
    %s81 = sphi 0, %s80
    %s95 = sphi 0, %s81
    %s103 = sphi 0, %s105
    %s106 = sphi 0, %s103
    %s107 = sphi 0, %s106
    %s123 = sphi 0, %s107
  $region4: #{cr_forward.1} parent=0 // loop_header_branch
    %12 = sbr.rel (%p10) target = $region8
  $region5: #{cr_forward.1} parent=0 // loop_body
    %s14 = ssub.s32 %s9, 1
    %s15 = ssub.s32 %s9, 2
    %s22 = sadd.s32 1, %s17
    %p23 = scmp.ge.s32.totalorder %s22, 1
    %s24 = scalar_select %p23, 0, %s22
    %s25 = sadd.s32 1, %s16
    %s26 = scalar_select %p23, %s25, %s16
    %p27 = scmp.ge.s32.totalorder %s26, 2
    %s28 = scalar_select %p27, 0, %s26
    %s29 = ssub.s32 %s16, %s28
    %s30 = ssub.s32 %s17, %s24
    %s31 = sor.u32 %s29, %s30
    %p32 = scmp.eq.s32.totalorder %s31, 0
    %s34 = sadd.s32 %s33, 1
    %s35 = scalar_select %p32, %s33, %s34
    %p38 = pneg %p32
    %p39 = scmp.eq.s32.totalorder %s9, 1
    %p40 = por %p38, %p39
    %p41 = scmp.ne.s32.totalorder %s33, %s36
    %p42 = scmp.eq.s32.totalorder %s9, 0
    %p43 = por %p41, %p42
    %p44 = scmp.ne.s32.totalorder %s33, %s36
    %p45 = scmp.eq.s32.totalorder %s14, 1
    %p46 = por %p44, %p45
    %p47 = scmp.ne.s32.totalorder %s36, %s37
    %p48 = scmp.eq.s32.totalorder %s14, 0
    %p49 = por %p47, %p48
    %p50 = scmp.ne.s32.totalorder %s36, %s37
    %p51 = scmp.eq.s32.totalorder %s15, 1
    %p52 = por %p50, %p51
    %p54 = scmp.ne.s32.totalorder %s37, %s53
    %p55 = scmp.eq.s32.totalorder %s15, 0
    %p56 = por %p54, %p55
    %s58 = sadd.s32 %s57, 1
    %p61 = scmp.eq.s32.totalorder %s9, 1
    %p62 = scmp.ne.s32.totalorder %s57, %s59
    %p63 = scmp.eq.s32.totalorder %s9, 0
    %p64 = por %p62, %p63
    %p65 = scmp.ne.s32.totalorder %s57, %s59
    %p66 = scmp.eq.s32.totalorder %s14, 1
    %p67 = por %p65, %p66
    %p68 = scmp.ne.s32.totalorder %s59, %s60
    %p69 = scmp.eq.s32.totalorder %s14, 0
    %p70 = por %p68, %p69
    %p71 = scmp.ne.s32.totalorder %s59, %s60
    %p72 = scmp.eq.s32.totalorder %s15, 1
    %p73 = por %p71, %p72
    %p75 = scmp.ne.s32.totalorder %s60, %s74
    %p76 = scmp.eq.s32.totalorder %s15, 0
    %p77 = por %p75, %p76
    %s79 = sadd.s32 %s78, 1
    %p82 = scmp.eq.s32.totalorder %s9, 1
    %p83 = scmp.ne.s32.totalorder %s78, %s80
    %p84 = scmp.eq.s32.totalorder %s9, 0
    %p85 = por %p83, %p84
    %p86 = scmp.ne.s32.totalorder %s78, %s80
    %p87 = scmp.eq.s32.totalorder %s14, 1
    %p88 = por %p86, %p87
    %p89 = scmp.ne.s32.totalorder %s80, %s81
    %p90 = scmp.eq.s32.totalorder %s14, 0
    %p91 = por %p89, %p90
    %p92 = scmp.ne.s32.totalorder %s80, %s81
    %p93 = scmp.eq.s32.totalorder %s15, 1
    %p94 = por %p92, %p93
    %p96 = scmp.ne.s32.totalorder %s81, %s95
    %p97 = scmp.eq.s32.totalorder %s15, 0
    %p98 = por %p96, %p97
    %s99 = ssub.s32 %s16, %s28
    %s100 = ssub.s32 %s17, %s24
    %s101 = sor.u32 %s99, %s100
    %p102 = scmp.eq.s32.totalorder %s101, 0
    %s104 = sadd.s32 %s103, 1
    %s105 = scalar_select %p102, %s103, %s104
    %p108 = pneg %p102
    %p109 = scmp.eq.s32.totalorder %s9, 1
    %p110 = por %p108, %p109
    %p111 = scmp.ne.s32.totalorder %s103, %s106
    %p112 = scmp.eq.s32.totalorder %s9, 0
    %p113 = por %p111, %p112
    %p114 = scmp.ne.s32.totalorder %s103, %s106
    %p115 = scmp.eq.s32.totalorder %s14, 1
    %p116 = por %p114, %p115
    %p117 = scmp.ne.s32.totalorder %s106, %s107
    %p118 = scmp.eq.s32.totalorder %s14, 0
    %p119 = por %p117, %p118
    %p120 = scmp.ne.s32.totalorder %s106, %s107
    %p121 = scmp.eq.s32.totalorder %s15, 1
    %p122 = por %p120, %p121
    %p124 = scmp.ne.s32.totalorder %s107, %s123
    %p125 = scmp.eq.s32.totalorder %s15, 0
    %p126 = por %p124, %p125
    %p127 = scmp.le.s32.totalorder 1, %s9
    %p128 = scmp.lt.s32.totalorder %s9, 3
    %p129 = pnand %p127, %p128
    %p130 = pneg %p129
    // Predicated region
    $region9: #{cr_forward.1} parent=5 // pred_check
      _
    $region10: #{cr_forward.1} parent=5 // pred_check_branch
      %132 = sbr.rel (%p129) target = $region12
    $region11: #{cr_forward.1} parent=5 // pred_region
      %s133 = ssub.s32 %s9, 1
      // Predicated region
      $region13: #{cr_forward.1} parent=11 // pred_check
        %p134 = pneg %p70
      $region14: #{cr_forward.1} parent=11 // pred_check_branch
        %136 = sbr.rel (%p134) target = $region16
      $region15: #{cr_forward.1} parent=11 // pred_region
        _
      $region16: #{cr_forward.1} parent=11 // pred_fallthru
        _
      // Predicated region
      $region17: #{cr_forward.1} parent=11 // pred_check
        %p137 = pneg %p91
      $region18: #{cr_forward.1} parent=11 // pred_check_branch
        %139 = sbr.rel (%p137) target = $region20
      $region19: #{cr_forward.1} parent=11 // pred_region
        _
      $region20: #{cr_forward.1} parent=11 // pred_fallthru
        _
    $region12: #{cr_forward.1} parent=5 // pred_fallthru
      _
    %p140 = scmp.lt.s32.totalorder %s9, 2
    // Predicated region
    $region21: #{cr_forward.1} parent=5 // pred_check
      %p141 = pneg %p140
    $region22: #{cr_forward.1} parent=5 // pred_check_branch
      %143 = sbr.rel (%p141) target = $region24
    $region23: #{cr_forward.1} parent=5 // pred_region
      // Predicated region
      $region25: #{cr_forward.1} parent=23 // pred_check
        %p144 = pneg %p43
      $region26: #{cr_forward.1} parent=23 // pred_check_branch
        %146 = sbr.rel (%p144) target = $region28
      $region27: #{cr_forward.1} parent=23 // pred_region
        %s147 = smul.u32 2, %s17
        %p148 = scmp.lt.s32.totalorder %s16, 1
        %s149 = scalar_select %p148, %s16, 1
        %p150 = scmp.lt.s32.totalorder %s147, 1
        %s151 = scalar_select %p150, %s147, 1
        %s152 = smul.addr %s149, 10
        %s153 = sadd.s32 %s151, %s152
        %s154 = smul.addr %s153, 8
        %s155 = scalar_lea.vmem %s0, %s154
        %s156 = smul.u32 2, %s17
      $region28: #{cr_forward.1} parent=23 // pred_fallthru
        _
    $region24: #{cr_forward.1} parent=5 // pred_fallthru
      _
    %p157 = scmp.le.s32.totalorder 1, %s9
    %p158 = scmp.lt.s32.totalorder %s9, 3
    %p159 = pnand %p157, %p158
    %p160 = pneg %p159
    // Predicated region
    $region29: #{cr_forward.1} parent=5 // pred_check
      _
    $region30: #{cr_forward.1} parent=5 // pred_check_branch
      %162 = sbr.rel (%p159) target = $region32
    $region31: #{cr_forward.1} parent=5 // pred_region
      %s163 = ssub.s32 %s9, 1
      %s164 = smul.u32 2, %s19
      %p165 = scmp.lt.s32.totalorder %s18, 1
      %s166 = scalar_select %p165, %s18, 1
      %p167 = scmp.lt.s32.totalorder %s164, 1
      %s168 = scalar_select %p167, %s164, 1
      %s169 = smul.addr %s166, 10
      %s170 = sadd.s32 %s168, %s169
      %s171 = smul.addr %s170, 8
      %s172 = scalar_lea.vmem %s0, %s171
      %p173 = pneg %p49
      %p174 = pneg %p46
      %p175 = pneg %p70
      %p176 = pneg %p67
      %p177 = pneg %p91
      %p178 = pneg %p88
      %p179 = pneg %p119
      %p180 = pneg %p116
      %s181 = smul.u32 2, %s19
      %p182 = scmp.lt.s32.totalorder %s18, 1
      %s183 = scalar_select %p182, %s18, 1
      %p184 = scmp.lt.s32.totalorder %s181, 1
      %s185 = scalar_select %p184, %s181, 1
      %s186 = smul.addr %s183, 2
      %s187 = sadd.s32 %s185, %s186
      %s188 = smul.addr %s187, 8
      %s189 = scalar_lea.vmem %s3, %s188
      %s190 = smul.u32 2, %s19
      %p191 = scmp.lt.s32.totalorder %s18, 1
      %s192 = scalar_select %p191, %s18, 1
      %p193 = scmp.lt.s32.totalorder %s190, 1
      %s194 = scalar_select %p193, %s190, 1
      %s195 = smul.addr %s192, 10
      %s196 = sadd.s32 %s194, %s195
      %s197 = smul.addr %s196, 8
      %s198 = scalar_lea.vmem %s0, %s197
      %s199 = smul.u32 2, %s19
      %s200 = smul.u32 2, %s19
      %p201 = scmp.lt.s32.totalorder %s18, 1
      %s202 = scalar_select %p201, %s18, 1
      %p203 = scmp.lt.s32.totalorder %s200, 1
      %s204 = scalar_select %p203, %s200, 1
      %s205 = smul.addr %s202, 2
      %s206 = sadd.s32 %s204, %s205
      %s207 = smul.addr %s206, 8
      %s208 = scalar_lea.vmem %s3, %s207
      %s209 = smul.u32 2, %s19
      %v210 = vld [vmem:[%s1] sm:$0xff]
      %v211 = vld [vmem:[%s198] sm:$0xff]
      %v212 = vld [vmem:[%s198 + $0x8] sm:$0xff]
      %v213 = vld [vmem:[%s198 + $0x10] sm:$0xff]
      %v214 = vld [vmem:[%s198 + $0x18] sm:$0xff]
      %v215 = vld [vmem:[%s198 + $0x20] sm:$0xff]
      %v216 = vld [vmem:[%s198 + $0x28] sm:$0xff]
      %v217 = vld [vmem:[%s198 + $0x30] sm:$0xff]
      %v218 = vld [vmem:[%s198 + $0x38] sm:$0xff]
      %v219 = vld [vmem:[%s198 + $0x40] sm:$0xf]
      %v220 = vld [vmem:[%s198 + $0x48] sm:$0xf]
      %v221 = vld [vmem:[%s2] sm:$0xff]
      %223 = vset.pattern.permute.xlu0 0
      %224 = vperm.xlu0 %223, %v221
      %v225 = vpop.permute.xlu0 %224
      %vm227 = vcmask 293888
      %v229 = vsel %vm227, %v210, 0
      %vm231 = vcmask 1043456
      %v233 = vsel %vm231, %v219, 0
      %v236 = vsel %vm231, %v220, 0
      %238 = vmatprep.subr.mxu0 0.0
      %239 = vmatpush1.msra.mxu0 0.0
      %240 = vmatprep.subr.mxu0 0.0
      %241 = vmatpush1.msra.mxu0 0.0
      %242 = vmatprep.subr.mxu0 0.0
      %243 = vmatpush1.msra.mxu0 0.0
      %244 = vmatprep.subr.mxu0 0.0
      %245 = vmatpush1.msra.mxu0 0.0
      %246 = vmatprep.subr.mxu0 0.0
      %247 = vmatpush1.msra.mxu0 0.0
      %248 = vmatprep.subr.mxu0 0.0
      %249 = vmatpush1.msra.mxu0 0.0
      %250 = vmatprep.subr.mxu0 0.0
      %251 = vmatpush1.msra.mxu0 0.0
      %252 = vmatprep.subr.mxu0 0.0
      %253 = vmatpush1.msra.mxu0 0.0
      %254 = vmatprep.subr.mxu0 0.0
      %255 = vmatpush1.msra.mxu0 0.0
      %256 = vmatprep.subr.mxu0 0.0
      %257 = vmatpush1.msra.mxu0 0.0
      %258 = vmatprep.subr.mxu0 0.0
      %259 = vmatpush1.msra.mxu0 0.0
      %260 = vmatprep.subr.mxu0 %v236
      %261 = vmatpush1.msra.mxu0 %v233
      %262 = vmatprep.subr.mxu0 %v218
      %263 = vmatpush1.msra.mxu0 %v217
      %264 = vmatprep.subr.mxu0 %v216
      %265 = vmatpush1.msra.mxu0 %v215
      %266 = vmatprep.subr.mxu0 %v214
      %267 = vmatpush1.msra.mxu0 %v213
      %268 = vmatprep.subr.mxu0 %v212
      %269 = vmatpush1.msra.mxu0 %v211
      %270 = vmatprep.subr.mxu0 0.0
      %271 = vmatpush2.msra.mxu0 0.0
      %272 = vmatprep.subr.mxu0 0.0
      %273 = vmatpush2.msra.mxu0 0.0
      %274 = vmatprep.subr.mxu0 0.0
      %275 = vmatpush2.msra.mxu0 0.0
      %276 = vmatprep.subr.mxu0 0.0
      %277 = vmatpush2.msra.mxu0 0.0
      %278 = vmatprep.subr.mxu0 0.0
      %279 = vmatpush2.msra.mxu0 0.0
      %280 = vmatprep.subr.mxu0 0.0
      %281 = vmatpush2.msra.mxu0 0.0
      %282 = vmatprep.subr.mxu0 0.0
      %283 = vmatpush2.msra.mxu0 0.0
      %284 = vmatprep.subr.mxu0 0.0
      %285 = vmatpush2.msra.mxu0 0.0
      %286 = vmatprep.subr.mxu0 0.0
      %287 = vmatpush2.msra.mxu0 0.0
      %288 = vmatprep.subr.mxu0 0.0
      %289 = vmatpush2.msra.mxu0 0.0
      %290 = vmatprep.subr.mxu0 0.0
      %291 = vmatpush2.msra.mxu0 0.0
      %292 = vmatprep.subr.mxu0 0.0
      %293 = vmatpush2.msra.mxu0 0.0
      %294 = vmatprep.subr.mxu0 0.0
      %295 = vmatpush2.msra.mxu0 0.0
      %296 = vmatprep.subr.mxu0 0.0
      %297 = vmatpush2.msra.mxu0 0.0
      %298 = vmatprep.subr.mxu0 0.0
      %299 = vmatpush2.msra.mxu0 0.0
      %300 = vmatprep.subr.mxu0 0.0
      %301 = vmatpush2.msra.mxu0 0.0
      %302 = vmatprep.mubr.f32.mxu0 0.0
      %303 = vmatmul.mubr.f32.gmra.mxu0 %v229
      %v304 = vpop.f32.mrf.mxu0
      %v305 = vadd.f32 %v225, %v304
      %v306 = vpop.f32.mrf.mxu0
      %v307 = vadd.f32 %v225, %v306
      %308 = vdwg.mxu0
      %v309 = vmax.f32 %v305, 0.0
      %v310 = vmax.f32 %v307, 0.0
      %311 = vst [vmem:[%s208] sm:$0xff] %v309
      %312 = vst [vmem:[%s208 + $0x8] sm:$0xff] %v310
      %s313 = smul.u32 2, %s19
      %p314 = scmp.lt.s32.totalorder %s18, 1
      %s315 = scalar_select %p314, %s18, 1
      %p316 = scmp.lt.s32.totalorder %s313, 1
      %s317 = scalar_select %p316, %s313, 1
      %s318 = smul.addr %s315, 2
      %s319 = sadd.s32 %s317, %s318
      %s320 = smul.addr %s319, 8
      %s321 = scalar_lea.vmem %s3, %s320
      // Predicated region
      $region33: #{cr_forward.1} parent=31 // pred_check
        %p322 = pneg %p116
      $region34: #{cr_forward.1} parent=31 // pred_check_branch
        %324 = sbr.rel (%p322) target = $region36
      $region35: #{cr_forward.1} parent=31 // pred_region
        %s325 = smul.u32 2, %s19
      $region36: #{cr_forward.1} parent=31 // pred_fallthru
        _
    $region32: #{cr_forward.1} parent=5 // pred_fallthru
      _
    %p326 = scmp.le.s32.totalorder 2, %s9
    // Predicated region
    $region37: #{cr_forward.1} parent=5 // pred_check
      %p327 = pneg %p326
    $region38: #{cr_forward.1} parent=5 // pred_check_branch
      %329 = sbr.rel (%p327) target = $region40
    $region39: #{cr_forward.1} parent=5 // pred_region
      %s330 = ssub.s32 %s9, 2
      // Predicated region
      $region41: #{cr_forward.1} parent=39 // pred_check
        %p331 = pneg %p122
      $region42: #{cr_forward.1} parent=39 // pred_check_branch
        %333 = sbr.rel (%p331) target = $region44
      $region43: #{cr_forward.1} parent=39 // pred_region
        %s334 = smul.u32 2, %s21
        %p335 = scmp.lt.s32.totalorder %s20, 1
        %s336 = scalar_select %p335, %s20, 1
        %p337 = scmp.lt.s32.totalorder %s334, 1
        %s338 = scalar_select %p337, %s334, 1
        %s339 = smul.addr %s336, 2
        %s340 = sadd.s32 %s338, %s339
        %s341 = smul.addr %s340, 8
        %s342 = scalar_lea.vmem %s3, %s341
      $region44: #{cr_forward.1} parent=39 // pred_fallthru
        _
    $region40: #{cr_forward.1} parent=5 // pred_fallthru
      _
  $region6: #{cr_forward.1} parent=0 // loop_footer
    %s13 = sadd.s32 1, %s9
  $region7: #{cr_forward.1} parent=0 // loop_footer_branch
    %8 = sbr.rel target = $region3
  $region8: #{cr_forward.1} parent=0 // loop_exit
    _

</llo_original>
